<compile_context>
chip_gen: v6e
topology: v6e:2x2x1
jax: 0.10.0
libtpu: 0.0.40
codegen_flags: <defaults>
</compile_context>

<pallas_src>
import functools

import jax
import jax.numpy as jnp
import numpy as np
from jax import lax
from jax.experimental import pallas as pl
from jax.experimental.pallas import tpu as pltpu

EPS = 1e-5
_STAT_ROWS = 8  # per-split partial-stat slab (8, feat) keeps (8,128) tiling legal


def _round_up(x, m):
    return (x + m - 1) // m * m


def _cdiv(a, b):
    return (a + b - 1) // b


def _pad_axis(a, axis, target, value=0.0):
    pad = target - a.shape[axis]
    if pad <= 0:
        return a
    widths = [(0, 0)] * a.ndim
    widths[axis] = (0, pad)
    return jnp.pad(a, widths, constant_values=value)


def _vmem_limit_bytes():
    """Generation-aware scoped-VMEM limit (v4/v5e/v6e: 128 MiB physical; v7x: 64 MiB)."""
    try:
        kind = jax.devices()[0].device_kind.lower()
    except Exception:
        kind = ""
    if "v2" in kind or "v3" in kind:
        return 12 * 1024 * 1024
    if any(t in kind for t in ("v4", "v5", "v6")):
        return 64 * 1024 * 1024
    return 48 * 1024 * 1024  # v7x / unknown: stay well under 64 MiB physical


def _pick_batch_tile(n_eff, in_dim, hidden_p, out_p, vmem_limit):
    """Largest batch tile whose double-buffered per-pass working set fits VMEM."""
    budget = int(vmem_limit * 0.70)
    small = 8 * _STAT_ROWS * max(hidden_p, out_p) * 4
    cap = 1024
    while cap > 64:
        p1 = 2 * cap * in_dim * 4 + 2 * in_dim * hidden_p * 2 + 2 * cap * hidden_p * 2
        p2 = 2 * cap * hidden_p * 2 + 2 * hidden_p * out_p * 2 + 2 * cap * out_p * 4
        p3 = 4 * cap * out_p * 4
        if max(p1, p2, p3) + small <= budget:
            break
        cap //= 2
    return min(cap, n_eff)


# ------------------- one-time parameter preparation (hoisted) -------------------
def prepare_params(w1, gamma1, beta1, w2):
    """Transpose PyTorch [out,in] weights, pad feature dims to 128-lane multiples,
    and pre-cast the weights to bf16 (MXU operand dtype). Run ONCE at setup."""
    hidden, in_dim = w1.shape
    out_dim, hidden2 = w2.shape
    assert hidden2 == hidden
    hidden_p = _round_up(hidden, 128)
    out_p = _round_up(out_dim, 128)
    w1t = _pad_axis(jnp.asarray(w1, jnp.float32).T, 1, hidden_p).astype(jnp.bfloat16)
    w2t = _pad_axis(_pad_axis(jnp.asarray(w2, jnp.float32).T, 0, hidden_p),
                    1, out_p).astype(jnp.bfloat16)
    gamma = _pad_axis(jnp.asarray(gamma1, jnp.float32).reshape(1, hidden), 1,
                      hidden_p, value=1.0)
    beta = _pad_axis(jnp.asarray(beta1, jnp.float32).reshape(1, hidden), 1, hidden_p)
    return w1t, gamma, beta, w2t


# --------------------- pass 1: h = x @ W1t  +  sum/sumsq ---------------------
def _lin1_stats_kernel(x_ref, w1t_ref, h_ref, sum_ref, sq_ref, *,
                       n_valid, tile_n, tiles_per_split):
    i = pl.program_id(0)          # split (parallel; v7x megacore shardable)
    j = pl.program_id(1)          # batch tile within split (arbitrary)

    @pl.when(j == 0)
    def _():
        sum_ref[...] = jnp.zeros_like(sum_ref)
        sq_ref[...] = jnp.zeros_like(sq_ref)

    # MXU: bf16 operands (weights pre-cast at setup), f32 accumulation.
    h = jnp.dot(x_ref[...].astype(jnp.bfloat16), w1t_ref[...],
                preferred_element_type=jnp.float32)          # [tile_n, Hp] f32
    # h is stored in bf16 (halves HBM traffic of the largest intermediate);
    # BN statistics are accumulated from the f32 value below.
    h_ref[...] = h.astype(h_ref.dtype)

    tile_start = (i * tiles_per_split + j) * tile_n
    is_ragged = tile_start + tile_n > n_valid

    @pl.when(jnp.logical_not(is_ragged))
    def _():
        sum_ref[0:1, :] = sum_ref[0:1, :] + jnp.sum(h, axis=0, keepdims=True)
        sq_ref[0:1, :] = sq_ref[0:1, :] + jnp.sum(h * h, axis=0, keepdims=True)

    @pl.when(is_ragged)
    def _():
        row = tile_start + lax.broadcasted_iota(jnp.int32, h.shape, 0)
        hm = jnp.where(row < n_valid, h, 0.0)
        sum_ref[0:1, :] = sum_ref[0:1, :] + jnp.sum(hm, axis=0, keepdims=True)
        sq_ref[0:1, :] = sq_ref[0:1, :] + jnp.sum(hm * hm, axis=0, keepdims=True)


# --------------- pass 2: bn1 + relu + y = h @ W2t  +  sum/sumsq ---------------
def _bn1_relu_lin2_stats_kernel(h_ref, sum1_ref, sq1_ref, gamma_ref, beta_ref,
                                w2t_ref, y_ref, sum2_ref, sq2_ref, *,
                                n_valid, tile_n, tiles_per_split):
    i = pl.program_id(0)
    j = pl.program_id(1)

    @pl.when(j == 0)
    def _():
        sum2_ref[...] = jnp.zeros_like(sum2_ref)
        sq2_ref[...] = jnp.zeros_like(sq2_ref)

    inv_n = jnp.float32(1.0 / n_valid)
    # Merge the per-split partial sums (slab rows) -> full-batch BN1 stats.
    s1 = jnp.sum(sum1_ref[...], axis=0, keepdims=True)
    q1 = jnp.sum(sq1_ref[...], axis=0, keepdims=True)
    mean1 = s1 * inv_n
    var1 = jnp.maximum(q1 * inv_n - mean1 * mean1, 0.0)
    scale1 = lax.rsqrt(var1 + EPS) * gamma_ref[...]
    shift1 = beta_ref[...] - mean1 * scale1

    a = jnp.maximum(h_ref[...].astype(jnp.float32) * scale1 + shift1, 0.0)

    y = jnp.dot(a.astype(jnp.bfloat16), w2t_ref[...],
                preferred_element_type=jnp.float32)          # [tile_n, Op] f32
    y_ref[...] = y

    tile_start = (i * tiles_per_split + j) * tile_n
    is_ragged = tile_start + tile_n > n_valid

    @pl.when(jnp.logical_not(is_ragged))
    def _():
        sum2_ref[0:1, :] = sum2_ref[0:1, :] + jnp.sum(y, axis=0, keepdims=True)
        sq2_ref[0:1, :] = sq2_ref[0:1, :] + jnp.sum(y * y, axis=0, keepdims=True)

    @pl.when(is_ragged)
    def _():
        row = tile_start + lax.broadcasted_iota(jnp.int32, y.shape, 0)
        ym = jnp.where(row < n_valid, y, 0.0)
        sum2_ref[0:1, :] = sum2_ref[0:1, :] + jnp.sum(ym, axis=0, keepdims=True)
        sq2_ref[0:1, :] = sq2_ref[0:1, :] + jnp.sum(ym * ym, axis=0, keepdims=True)


# ------------------------------ pass 3: bn2 ------------------------------
def _bn2_kernel(y_ref, sum2_ref, sq2_ref, out_ref, *, n_valid):
    inv_n = jnp.float32(1.0 / n_valid)
    s = jnp.sum(sum2_ref[...], axis=0, keepdims=True)
    q = jnp.sum(sq2_ref[...], axis=0, keepdims=True)
    mean2 = s * inv_n
    var2 = jnp.maximum(q * inv_n - mean2 * mean2, 0.0)
    out_ref[...] = (y_ref[...] - mean2) * lax.rsqrt(var2 + EPS)


# ------------------------------ forward wrapper ------------------------------
def projection_mlp_orchestra(x, w1t, gamma1, beta1, w2t, *, out_dim, tile_n=None):
    """Forward pass of ProjectionMLPOrchestra (training-mode batch norm).

    x:      [N, in_dim]                 float32
    w1t:    [in_dim, hidden_p]          bf16, from prepare_params
    gamma1: [1, hidden_p], beta1: [1, hidden_p]  float32 (padded)
    w2t:    [hidden_p, out_p]           bf16, from prepare_params
    returns [N, out_dim] float32
    """
    n, in_dim = x.shape
    hidden_p = w1t.shape[1]
    out_p = w2t.shape[1]

    n_eff = _round_up(n, 8)
    vmem_limit = _vmem_limit_bytes()
    if tile_n is None:
        tn = _pick_batch_tile(n_eff, in_dim, hidden_p, out_p, vmem_limit)
    else:
        tn = min(max(int(tile_n), 8), max(n_eff, 16))

    num_tiles = _cdiv(n, tn)
    if num_tiles > 1:
        # Multi-tile blocks of the bf16 h array: keep 16-row (bf16 sublane) alignment.
        tn = max(16, (tn // 16) * 16)
        num_tiles = _cdiv(n, tn)

    # Two splits so passes 1-2 can shard across both v7x TensorCores.
    num_splits = 2 if num_tiles >= 2 else 1
    tiles_per_split = _cdiv(num_tiles, num_splits)
    n_pad = num_splits * tiles_per_split * tn
    stat_rows = num_splits * _STAT_ROWS

    xp = _pad_axis(x.astype(jnp.float32), 0, n_pad)

    f32, bf16 = jnp.float32, jnp.bfloat16
    grid2d = (num_splits, tiles_per_split)
    seq_params = pltpu.CompilerParams(
        dimension_semantics=("parallel", "arbitrary"), vmem_limit_bytes=vmem_limit)
    par_params = pltpu.CompilerParams(
        dimension_semantics=("parallel",), vmem_limit_bytes=vmem_limit)

    # ---- pass 1: linear1 + BN1 statistics ----
    h, sum1, sq1 = pl.pallas_call(
        functools.partial(_lin1_stats_kernel, n_valid=n, tile_n=tn,
                          tiles_per_split=tiles_per_split),
        out_shape=(jax.ShapeDtypeStruct((n_pad, hidden_p), bf16),
                   jax.ShapeDtypeStruct((stat_rows, hidden_p), f32),
                   jax.ShapeDtypeStruct((stat_rows, hidden_p), f32)),
        grid=grid2d,
        in_specs=[pl.BlockSpec((tn, in_dim), lambda i, j: (i * tiles_per_split + j, 0)),
                  pl.BlockSpec((in_dim, hidden_p), lambda i, j: (0, 0))],
        out_specs=(pl.BlockSpec((tn, hidden_p), lambda i, j: (i * tiles_per_split + j, 0)),
                   pl.BlockSpec((_STAT_ROWS, hidden_p), lambda i, j: (i, 0)),
                   pl.BlockSpec((_STAT_ROWS, hidden_p), lambda i, j: (i, 0))),
        compiler_params=seq_params,
    )(xp, w1t)

    # ---- pass 2: BN1 + relu + linear2 + BN2 statistics ----
    y, sum2, sq2 = pl.pallas_call(
        functools.partial(_bn1_relu_lin2_stats_kernel, n_valid=n, tile_n=tn,
                          tiles_per_split=tiles_per_split),
        out_shape=(jax.ShapeDtypeStruct((n_pad, out_p), f32),
                   jax.ShapeDtypeStruct((stat_rows, out_p), f32),
                   jax.ShapeDtypeStruct((stat_rows, out_p), f32)),
        grid=grid2d,
        in_specs=[pl.BlockSpec((tn, hidden_p), lambda i, j: (i * tiles_per_split + j, 0)),
                  pl.BlockSpec((stat_rows, hidden_p), lambda i, j: (0, 0)),
                  pl.BlockSpec((stat_rows, hidden_p), lambda i, j: (0, 0)),
                  pl.BlockSpec((1, hidden_p), lambda i, j: (0, 0)),
                  pl.BlockSpec((1, hidden_p), lambda i, j: (0, 0)),
                  pl.BlockSpec((hidden_p, out_p), lambda i, j: (0, 0))],
        out_specs=(pl.BlockSpec((tn, out_p), lambda i, j: (i * tiles_per_split + j, 0)),
                   pl.BlockSpec((_STAT_ROWS, out_p), lambda i, j: (i, 0)),
                   pl.BlockSpec((_STAT_ROWS, out_p), lambda i, j: (i, 0))),
        compiler_params=seq_params,
    )(h, sum1, sq1, gamma1, beta1, w2t)

    # ---- pass 3: BN2 normalization (independent batch tiles) ----
    out = pl.pallas_call(
        functools.partial(_bn2_kernel, n_valid=n),
        out_shape=jax.ShapeDtypeStruct((n_pad, out_p), f32),
        grid=(num_splits * tiles_per_split,),
        in_specs=[pl.BlockSpec((tn, out_p), lambda t: (t, 0)),
                  pl.BlockSpec((stat_rows, out_p), lambda t: (0, 0)),
                  pl.BlockSpec((stat_rows, out_p), lambda t: (0, 0))],
        out_specs=pl.BlockSpec((tn, out_p), lambda t: (t, 0)),
        compiler_params=par_params,
    )(y, sum2, sq2)

    if n_pad == n and out_p == out_dim:
        return out
    return out[:n, :out_dim]


# ------------------------------ references ------------------------------
def _reference_f32(x, w1, gamma1, beta1, w2):
    """Pure f32 math, identical to PyTorch training-mode forward."""
    h = x @ w1.T
    m = h.mean(0, keepdims=True)
    v = ((h - m) ** 2).mean(0, keepdims=True)
    h = jnp.maximum((h - m) / jnp.sqrt(v + EPS) * gamma1[None, :] + beta1[None, :], 0.0)
    y = h @ w2.T
    m2 = y.mean(0, keepdims=True)
    v2 = ((y - m2) ** 2).mean(0, keepdims=True)
    return (y - m2) / jnp.sqrt(v2 + EPS)


def _reference_mxu(x, w1, gamma1, beta1, w2):
    """Same math mirroring the kernel's precision (bf16 MXU operands, bf16 h storage)."""
    h = jnp.dot(x.astype(jnp.bfloat16), w1.T.astype(jnp.bfloat16),
                preferred_element_type=jnp.float32)
    m = h.mean(0, keepdims=True)
    v = jnp.maximum((h * h).mean(0, keepdims=True) - m * m, 0.0)
    scale = lax.rsqrt(v + EPS) * gamma1[None, :]
    shift = beta1[None, :] - m * scale
    hq = h.astype(jnp.bfloat16).astype(jnp.float32)
    a = jnp.maximum(hq * scale + shift, 0.0)
    y = jnp.dot(a.astype(jnp.bfloat16), w2.T.astype(jnp.bfloat16),
                preferred_element_type=jnp.float32)
    m2 = y.mean(0, keepdims=True)
    v2 = jnp.maximum((y * y).mean(0, keepdims=True) - m2 * m2, 0.0)
    return (y - m2) * lax.rsqrt(v2 + EPS)


if __name__ == "__main__":
    def run_case(n, in_dim, hidden, out_dim, tile_n):
        key = jax.random.PRNGKey(0)
        kx, kw1, kw2, kg, kb = jax.random.split(key, 5)
        x = jax.random.normal(kx, (n, in_dim), dtype=jnp.float32)
        # PyTorch parameter layouts: Linear weight is [out_features, in_features].
        w1 = jax.random.normal(kw1, (hidden, in_dim), jnp.float32) / np.sqrt(in_dim)
        w2 = jax.random.normal(kw2, (out_dim, hidden), jnp.float32) / np.sqrt(hidden)
        gamma1 = 1.0 + 0.1 * jax.random.normal(kg, (hidden,), jnp.float32)
        beta1 = 0.1 * jax.random.normal(kb, (hidden,), jnp.float32)

        # One-time parameter prep (transpose + pad + bf16 cast), outside the jit.
        w1t, gamma_p, beta_p, w2t = prepare_params(w1, gamma1, beta1, w2)

        fwd = jax.jit(functools.partial(projection_mlp_orchestra,
                                        out_dim=out_dim, tile_n=tile_n))
        out = jax.block_until_ready(fwd(x, w1t, gamma_p, beta_p, w2t))
        assert out.shape == (n, out_dim)

        o = np.asarray(out)
        ref_m = np.asarray(_reference_mxu(x, w1, gamma1, beta1, w2))
        ref_f = np.asarray(_reference_f32(x, w1, gamma1, beta1, w2))
        # Tight check against a reference with identical MXU / storage precision.
        assert np.allclose(o, ref_m, atol=5e-3, rtol=5e-3), \
            float(np.max(np.abs(o - ref_m)))
        # Sanity check against the pure-f32 (PyTorch-equivalent) math.
        assert np.allclose(o, ref_f, atol=5e-2, rtol=5e-2), \
            float(np.max(np.abs(o - ref_f)))

    # Small shapes consistent with ProjectionMLPOrchestra(in_dim=32, hidden_dim=64,
    # out_dim=64), batch of 8; auto tile selection (single tile).
    run_case(n=8, in_dim=32, hidden=64, out_dim=64, tile_n=None)
    # Second small case exercising multi-tile batch, the 2-split parallel grid,
    # ragged-tile masking and row/column padding paths.
    run_case(n=48, in_dim=32, hidden=256, out_dim=128, tile_n=16)

    print("KERNEL_OK")
</pallas_src>

<mosaic_0001>
module attributes {stable_mosaic.version = 11 : i64} {
  func.func @_bn1_relu_lin2_stats_kernel(%arg0: i32, %arg1: i32, %arg2: memref<8x128xbf16, #tpu.memory_space<vmem>>, %arg3: memref<8x128xf32, #tpu.memory_space<vmem>>, %arg4: memref<8x128xf32, #tpu.memory_space<vmem>>, %arg5: memref<1x128xf32, #tpu.memory_space<vmem>>, %arg6: memref<1x128xf32, #tpu.memory_space<vmem>>, %arg7: memref<128x128xbf16, #tpu.memory_space<vmem>>, %arg8: memref<8x128xf32, #tpu.memory_space<vmem>>, %arg9: memref<8x128xf32, #tpu.memory_space<vmem>>, %arg10: memref<8x128xf32, #tpu.memory_space<vmem>>) attributes {dimension_semantics = [#tpu.dimension_semantics<parallel>, #tpu.dimension_semantics<arbitrary>], iteration_bounds = array<i64: 1, 1>, scalar_prefetch = 0 : i64, scratch_operands = 0 : i64, tpu.core_type = #tpu.core_type<tc>, window_params = [{transform_indices = @transform_0, window_bounds = array<i64: 8, 128>}, {pipeline_mode = #tpu.pipeline_mode<synchronous>, transform_indices = @transform_1, window_bounds = array<i64: 8, 128>}, {pipeline_mode = #tpu.pipeline_mode<synchronous>, transform_indices = @transform_2, window_bounds = array<i64: 8, 128>}, {pipeline_mode = #tpu.pipeline_mode<synchronous>, transform_indices = @transform_3, window_bounds = array<i64: 1, 128>}, {pipeline_mode = #tpu.pipeline_mode<synchronous>, transform_indices = @transform_4, window_bounds = array<i64: 1, 128>}, {pipeline_mode = #tpu.pipeline_mode<synchronous>, transform_indices = @transform_5, window_bounds = array<i64: 128, 128>}, {transform_indices = @transform_6, window_bounds = array<i64: 8, 128>}, {transform_indices = @transform_7, window_bounds = array<i64: 8, 128>}, {transform_indices = @transform_8, window_bounds = array<i64: 8, 128>}]} {
    %c0_i32 = arith.constant 0 : i32
    %0 = arith.cmpi eq, %arg1, %c0_i32 : i32
    %1 = arith.extui %0 : i1 to i32
    %c0_i32_0 = arith.constant 0 : i32
    %2 = arith.cmpi ne, %1, %c0_i32_0 : i32
    scf.if %2 {
      %cst_25 = arith.constant 0.000000e+00 : f32
      %47 = vector.broadcast %cst_25 : f32 to vector<8x128xf32>
      %c0_26 = arith.constant 0 : index
      %c0_27 = arith.constant 0 : index
      %48 = vector.load %arg9[%c0_26, %c0_27] : memref<8x128xf32, #tpu.memory_space<vmem>>, vector<8x128xf32>
      tpu.vector_store %arg9[%c0_26, %c0_27], %47 {strides = array<i32>} : memref<8x128xf32, #tpu.memory_space<vmem>>, vector<8x128xf32>,
      %cst_28 = arith.constant 0.000000e+00 : f32
      %49 = vector.broadcast %cst_28 : f32 to vector<8x128xf32>
      %c0_29 = arith.constant 0 : index
      %c0_30 = arith.constant 0 : index
      %50 = vector.load %arg10[%c0_29, %c0_30] : memref<8x128xf32, #tpu.memory_space<vmem>>, vector<8x128xf32>
      tpu.vector_store %arg10[%c0_29, %c0_30], %49 {strides = array<i32>} : memref<8x128xf32, #tpu.memory_space<vmem>>, vector<8x128xf32>,
    } else {
    }
    %c0 = arith.constant 0 : index
    %c0_1 = arith.constant 0 : index
    %3 = vector.load %arg3[%c0, %c0_1] : memref<8x128xf32, #tpu.memory_space<vmem>>, vector<8x128xf32>
    %cst = arith.constant dense<0.000000e+00> : vector<128xf32>
    %4 = vector.multi_reduction <add>, %3, %cst [0] : vector<8x128xf32> to vector<128xf32>
    %5 = vector.shape_cast %4 : vector<128xf32> to vector<1x128xf32>
    %c0_2 = arith.constant 0 : index
    %c0_3 = arith.constant 0 : index
    %6 = vector.load %arg4[%c0_2, %c0_3] : memref<8x128xf32, #tpu.memory_space<vmem>>, vector<8x128xf32>
    %cst_4 = arith.constant dense<0.000000e+00> : vector<128xf32>
    %7 = vector.multi_reduction <add>, %6, %cst_4 [0] : vector<8x128xf32> to vector<128xf32>
    %8 = vector.shape_cast %7 : vector<128xf32> to vector<1x128xf32>
    %cst_5 = arith.constant 1.250000e-01 : f32
    %9 = vector.broadcast %cst_5 : f32 to vector<1x128xf32>
    %10 = arith.mulf %5, %9 : vector<1x128xf32>
    %cst_6 = arith.constant 1.250000e-01 : f32
    %11 = vector.broadcast %cst_6 : f32 to vector<1x128xf32>
    %12 = arith.mulf %8, %11 : vector<1x128xf32>
    %13 = arith.mulf %10, %10 : vector<1x128xf32>
    %14 = arith.subf %12, %13 : vector<1x128xf32>
    %cst_7 = arith.constant 0.000000e+00 : f32
    %15 = vector.broadcast %cst_7 : f32 to vector<1x128xf32>
    %16 = arith.maximumf %14, %15 : vector<1x128xf32>
    %cst_8 = arith.constant 9.99999974E-6 : f32
    %17 = vector.broadcast %cst_8 : f32 to vector<1x128xf32>
    %18 = arith.addf %16, %17 : vector<1x128xf32>
    %19 = math.rsqrt %18 : vector<1x128xf32>
    %c0_9 = arith.constant 0 : index
    %c0_10 = arith.constant 0 : index
    %20 = vector.load %arg5[%c0_9, %c0_10] : memref<1x128xf32, #tpu.memory_space<vmem>>, vector<1x128xf32>
    %21 = arith.mulf %19, %20 : vector<1x128xf32>
    %c0_11 = arith.constant 0 : index
    %c0_12 = arith.constant 0 : index
    %22 = vector.load %arg6[%c0_11, %c0_12] : memref<1x128xf32, #tpu.memory_space<vmem>>, vector<1x128xf32>
    %23 = arith.mulf %10, %21 : vector<1x128xf32>
    %24 = arith.subf %22, %23 : vector<1x128xf32>
    %c0_13 = arith.constant 0 : index
    %c0_14 = arith.constant 0 : index
    %25 = vector.load %arg2[%c0_13, %c0_14] : memref<8x128xbf16, #tpu.memory_space<vmem>>, vector<8x128xbf16>
    %26 = arith.extf %25 : vector<8x128xbf16> to vector<8x128xf32>
    %27 = vector.broadcast %21 : vector<1x128xf32> to vector<8x128xf32>
    %28 = arith.mulf %26, %27 : vector<8x128xf32>
    %29 = vector.broadcast %24 : vector<1x128xf32> to vector<8x128xf32>
    %30 = arith.addf %28, %29 : vector<8x128xf32>
    %cst_15 = arith.constant 0.000000e+00 : f32
    %31 = vector.broadcast %cst_15 : f32 to vector<8x128xf32>
    %32 = arith.maximumf %30, %31 : vector<8x128xf32>
    %33 = arith.truncf %32 : vector<8x128xf32> to vector<8x128xbf16>
    %c0_16 = arith.constant 0 : index
    %c0_17 = arith.constant 0 : index
    %34 = vector.load %arg7[%c0_16, %c0_17] : memref<128x128xbf16, #tpu.memory_space<vmem>>, vector<128x128xbf16>
    %cst_18 = arith.constant dense<0.000000e+00> : vector<8x128xf32>
    %35 = tpu.matmul %33, %34, %cst_18 {dimension_numbers = #tpu.dot_dimension_numbers<[1], [0], [0], [1], [0, 0, 1, 1], [], []>} : vector<8x128xbf16>, vector<128x128xbf16>, vector<8x128xf32> -> vector<8x128xf32>
    %c0_19 = arith.constant 0 : index
    %c0_20 = arith.constant 0 : index
    %36 = vector.load %arg8[%c0_19, %c0_20] : memref<8x128xf32, #tpu.memory_space<vmem>>, vector<8x128xf32>
    tpu.vector_store %arg8[%c0_19, %c0_20], %35 {strides = array<i32>} : memref<8x128xf32, #tpu.memory_space<vmem>>, vector<8x128xf32>,
    %c1_i32 = arith.constant 1 : i32
    %37 = arith.muli %arg0, %c1_i32 : i32
    %38 = arith.addi %37, %arg1 : i32
    %c8_i32 = arith.constant 8 : i32
    %39 = arith.muli %38, %c8_i32 : i32
    %c8_i32_21 = arith.constant 8 : i32
    %40 = arith.addi %39, %c8_i32_21 : i32
    %c8_i32_22 = arith.constant 8 : i32
    %41 = arith.cmpi sgt, %40, %c8_i32_22 : i32
    %true = arith.constant true
    %42 = arith.xori %41, %true : i1
    %43 = arith.extui %42 : i1 to i32
    %c0_i32_23 = arith.constant 0 : i32
    %44 = arith.cmpi ne, %43, %c0_i32_23 : i32
    scf.if %44 {
      %c0_25 = arith.constant 0 : index
      %c0_26 = arith.constant 0 : index
      %47 = vector.load %arg9[%c0_25, %c0_26] : memref<8x128xf32, #tpu.memory_space<vmem>>, vector<1x128xf32>
      %cst_27 = arith.constant dense<0.000000e+00> : vector<128xf32>
      %48 = vector.multi_reduction <add>, %35, %cst_27 [0] : vector<8x128xf32> to vector<128xf32>
      %49 = vector.shape_cast %48 : vector<128xf32> to vector<1x128xf32>
      %50 = arith.addf %47, %49 : vector<1x128xf32>
      %c0_28 = arith.constant 0 : index
      %c0_29 = arith.constant 0 : index
      %51 = vector.load %arg9[%c0_28, %c0_29] : memref<8x128xf32, #tpu.memory_space<vmem>>, vector<1x128xf32>
      tpu.vector_store %arg9[%c0_28, %c0_29], %50 {strides = array<i32>} : memref<8x128xf32, #tpu.memory_space<vmem>>, vector<1x128xf32>,
      %c0_30 = arith.constant 0 : index
      %c0_31 = arith.constant 0 : index
      %52 = vector.load %arg10[%c0_30, %c0_31] : memref<8x128xf32, #tpu.memory_space<vmem>>, vector<1x128xf32>
      %53 = arith.mulf %35, %35 : vector<8x128xf32>
      %cst_32 = arith.constant dense<0.000000e+00> : vector<128xf32>
      %54 = vector.multi_reduction <add>, %53, %cst_32 [0] : vector<8x128xf32> to vector<128xf32>
      %55 = vector.shape_cast %54 : vector<128xf32> to vector<1x128xf32>
      %56 = arith.addf %52, %55 : vector<1x128xf32>
      %c0_33 = arith.constant 0 : index
      %c0_34 = arith.constant 0 : index
      %57 = vector.load %arg10[%c0_33, %c0_34] : memref<8x128xf32, #tpu.memory_space<vmem>>, vector<1x128xf32>
      tpu.vector_store %arg10[%c0_33, %c0_34], %56 {strides = array<i32>} : memref<8x128xf32, #tpu.memory_space<vmem>>, vector<1x128xf32>,
    } else {
    }
    %45 = arith.extui %41 : i1 to i32
    %c0_i32_24 = arith.constant 0 : i32
    %46 = arith.cmpi ne, %45, %c0_i32_24 : i32
    scf.if %46 {
      %47 = tpu.iota {dimensions = array<i32: 0>} : vector<8x128xi32>
      %48 = vector.broadcast %39 : i32 to vector<8x128xi32>
      %49 = arith.addi %48, %47 : vector<8x128xi32>
      %c8_i32_25 = arith.constant 8 : i32
      %50 = vector.broadcast %c8_i32_25 : i32 to vector<8x128xi32>
      %51 = arith.cmpi slt, %49, %50 : vector<8x128xi32>
      %cst_26 = arith.constant 0.000000e+00 : f32
      %52 = vector.broadcast %cst_26 : f32 to vector<8x128xf32>
      %53 = arith.select %51, %35, %52 : vector<8x128xi1>, vector<8x128xf32>
      %c0_27 = arith.constant 0 : index
      %c0_28 = arith.constant 0 : index
      %54 = vector.load %arg9[%c0_27, %c0_28] : memref<8x128xf32, #tpu.memory_space<vmem>>, vector<1x128xf32>
      %cst_29 = arith.constant dense<0.000000e+00> : vector<128xf32>
      %55 = vector.multi_reduction <add>, %53, %cst_29 [0] : vector<8x128xf32> to vector<128xf32>
      %56 = vector.shape_cast %55 : vector<128xf32> to vector<1x128xf32>
      %57 = arith.addf %54, %56 : vector<1x128xf32>
      %c0_30 = arith.constant 0 : index
      %c0_31 = arith.constant 0 : index
      %58 = vector.load %arg9[%c0_30, %c0_31] : memref<8x128xf32, #tpu.memory_space<vmem>>, vector<1x128xf32>
      tpu.vector_store %arg9[%c0_30, %c0_31], %57 {strides = array<i32>} : memref<8x128xf32, #tpu.memory_space<vmem>>, vector<1x128xf32>,
      %c0_32 = arith.constant 0 : index
      %c0_33 = arith.constant 0 : index
      %59 = vector.load %arg10[%c0_32, %c0_33] : memref<8x128xf32, #tpu.memory_space<vmem>>, vector<1x128xf32>
      %60 = arith.mulf %53, %53 : vector<8x128xf32>
      %cst_34 = arith.constant dense<0.000000e+00> : vector<128xf32>
      %61 = vector.multi_reduction <add>, %60, %cst_34 [0] : vector<8x128xf32> to vector<128xf32>
      %62 = vector.shape_cast %61 : vector<128xf32> to vector<1x128xf32>
      %63 = arith.addf %59, %62 : vector<1x128xf32>
      %c0_35 = arith.constant 0 : index
      %c0_36 = arith.constant 0 : index
      %64 = vector.load %arg10[%c0_35, %c0_36] : memref<8x128xf32, #tpu.memory_space<vmem>>, vector<1x128xf32>
      tpu.vector_store %arg10[%c0_35, %c0_36], %63 {strides = array<i32>} : memref<8x128xf32, #tpu.memory_space<vmem>>, vector<1x128xf32>,
    } else {
    }
    return
  }
  func.func @transform_0(%arg0: i32, %arg1: i32) -> (i32, i32) {
    %c1_i32 = arith.constant 1 : i32
    %0 = arith.muli %arg0, %c1_i32 : i32
    %1 = arith.addi %0, %arg1 : i32
    %c0_i32 = arith.constant 0 : i32
    %c0_i32_0 = arith.constant 0 : i32
    return %1, %c0_i32 : i32, i32
  }
  func.func @transform_1(%arg0: i32, %arg1: i32) -> (i32, i32) {
    %c0_i32 = arith.constant 0 : i32
    %c0_i32_0 = arith.constant 0 : i32
    %c0_i32_1 = arith.constant 0 : i32
    return %c0_i32, %c0_i32_0 : i32, i32
  }
  func.func @transform_2(%arg0: i32, %arg1: i32) -> (i32, i32) {
    %c0_i32 = arith.constant 0 : i32
    %c0_i32_0 = arith.constant 0 : i32
    %c0_i32_1 = arith.constant 0 : i32
    return %c0_i32, %c0_i32_0 : i32, i32
  }
  func.func @transform_3(%arg0: i32, %arg1: i32) -> (i32, i32) {
    %c0_i32 = arith.constant 0 : i32
    %c0_i32_0 = arith.constant 0 : i32
    %c0_i32_1 = arith.constant 0 : i32
    return %c0_i32, %c0_i32_0 : i32, i32
  }
  func.func @transform_4(%arg0: i32, %arg1: i32) -> (i32, i32) {
    %c0_i32 = arith.constant 0 : i32
    %c0_i32_0 = arith.constant 0 : i32
    %c0_i32_1 = arith.constant 0 : i32
    return %c0_i32, %c0_i32_0 : i32, i32
  }
  func.func @transform_5(%arg0: i32, %arg1: i32) -> (i32, i32) {
    %c0_i32 = arith.constant 0 : i32
    %c0_i32_0 = arith.constant 0 : i32
    %c0_i32_1 = arith.constant 0 : i32
    return %c0_i32, %c0_i32_0 : i32, i32
  }
  func.func @transform_6(%arg0: i32, %arg1: i32) -> (i32, i32) {
    %c1_i32 = arith.constant 1 : i32
    %0 = arith.muli %arg0, %c1_i32 : i32
    %1 = arith.addi %0, %arg1 : i32
    %c0_i32 = arith.constant 0 : i32
    %c0_i32_0 = arith.constant 0 : i32
    return %1, %c0_i32 : i32, i32
  }
  func.func @transform_7(%arg0: i32, %arg1: i32) -> (i32, i32) {
    %c0_i32 = arith.constant 0 : i32
    %c0_i32_0 = arith.constant 0 : i32
    return %arg0, %c0_i32 : i32, i32
  }
  func.func @transform_8(%arg0: i32, %arg1: i32) -> (i32, i32) {
    %c0_i32 = arith.constant 0 : i32
    %c0_i32_0 = arith.constant 0 : i32
    return %arg0, %c0_i32 : i32, i32
  }
}

module attributes {stable_mosaic.version = 11 : i64} {
  func.func @_lin1_stats_kernel(%arg0: i32, %arg1: i32, %arg2: memref<8x32xf32, #tpu.memory_space<vmem>>, %arg3: memref<32x128xbf16, #tpu.memory_space<vmem>>, %arg4: memref<8x128xbf16, #tpu.memory_space<vmem>>, %arg5: memref<8x128xf32, #tpu.memory_space<vmem>>, %arg6: memref<8x128xf32, #tpu.memory_space<vmem>>) attributes {dimension_semantics = [#tpu.dimension_semantics<parallel>, #tpu.dimension_semantics<arbitrary>], iteration_bounds = array<i64: 1, 1>, scalar_prefetch = 0 : i64, scratch_operands = 0 : i64, tpu.core_type = #tpu.core_type<tc>, window_params = [{transform_indices = @transform_0, window_bounds = array<i64: 8, 32>}, {pipeline_mode = #tpu.pipeline_mode<synchronous>, transform_indices = @transform_1, window_bounds = array<i64: 32, 128>}, {transform_indices = @transform_2, window_bounds = array<i64: 8, 128>}, {transform_indices = @transform_3, window_bounds = array<i64: 8, 128>}, {transform_indices = @transform_4, window_bounds = array<i64: 8, 128>}]} {
    %c0_i32 = arith.constant 0 : i32
    %0 = arith.cmpi eq, %arg1, %c0_i32 : i32
    %1 = arith.extui %0 : i1 to i32
    %c0_i32_0 = arith.constant 0 : i32
    %2 = arith.cmpi ne, %1, %c0_i32_0 : i32
    scf.if %2 {
      %cst_10 = arith.constant 0.000000e+00 : f32
      %19 = vector.broadcast %cst_10 : f32 to vector<8x128xf32>
      %c0_11 = arith.constant 0 : index
      %c0_12 = arith.constant 0 : index
      %20 = vector.load %arg5[%c0_11, %c0_12] : memref<8x128xf32, #tpu.memory_space<vmem>>, vector<8x128xf32>
      tpu.vector_store %arg5[%c0_11, %c0_12], %19 {strides = array<i32>} : memref<8x128xf32, #tpu.memory_space<vmem>>, vector<8x128xf32>,
      %cst_13 = arith.constant 0.000000e+00 : f32
      %21 = vector.broadcast %cst_13 : f32 to vector<8x128xf32>
      %c0_14 = arith.constant 0 : index
      %c0_15 = arith.constant 0 : index
      %22 = vector.load %arg6[%c0_14, %c0_15] : memref<8x128xf32, #tpu.memory_space<vmem>>, vector<8x128xf32>
      tpu.vector_store %arg6[%c0_14, %c0_15], %21 {strides = array<i32>} : memref<8x128xf32, #tpu.memory_space<vmem>>, vector<8x128xf32>,
    } else {
    }
    %c0 = arith.constant 0 : index
    %c0_1 = arith.constant 0 : index
    %3 = vector.load %arg2[%c0, %c0_1] : memref<8x32xf32, #tpu.memory_space<vmem>>, vector<8x32xf32>
    %4 = arith.truncf %3 : vector<8x32xf32> to vector<8x32xbf16>
    %c0_2 = arith.constant 0 : index
    %c0_3 = arith.constant 0 : index
    %5 = vector.load %arg3[%c0_2, %c0_3] : memref<32x128xbf16, #tpu.memory_space<vmem>>, vector<32x128xbf16>
    %cst = arith.constant dense<0.000000e+00> : vector<8x128xf32>
    %6 = tpu.matmul %4, %5, %cst {dimension_numbers = #tpu.dot_dimension_numbers<[1], [0], [0], [1], [0, 0, 1, 1], [], []>} : vector<8x32xbf16>, vector<32x128xbf16>, vector<8x128xf32> -> vector<8x128xf32>
    %7 = arith.truncf %6 : vector<8x128xf32> to vector<8x128xbf16>
    %c0_4 = arith.constant 0 : index
    %c0_5 = arith.constant 0 : index
    %8 = vector.load %arg4[%c0_4, %c0_5] : memref<8x128xbf16, #tpu.memory_space<vmem>>, vector<8x128xbf16>
    tpu.vector_store %arg4[%c0_4, %c0_5], %7 {strides = array<i32>} : memref<8x128xbf16, #tpu.memory_space<vmem>>, vector<8x128xbf16>,
    %c1_i32 = arith.constant 1 : i32
    %9 = arith.muli %arg0, %c1_i32 : i32
    %10 = arith.addi %9, %arg1 : i32
    %c8_i32 = arith.constant 8 : i32
    %11 = arith.muli %10, %c8_i32 : i32
    %c8_i32_6 = arith.constant 8 : i32
    %12 = arith.addi %11, %c8_i32_6 : i32
    %c8_i32_7 = arith.constant 8 : i32
    %13 = arith.cmpi sgt, %12, %c8_i32_7 : i32
    %true = arith.constant true
    %14 = arith.xori %13, %true : i1
    %15 = arith.extui %14 : i1 to i32
    %c0_i32_8 = arith.constant 0 : i32
    %16 = arith.cmpi ne, %15, %c0_i32_8 : i32
    scf.if %16 {
      %c0_10 = arith.constant 0 : index
      %c0_11 = arith.constant 0 : index
      %19 = vector.load %arg5[%c0_10, %c0_11] : memref<8x128xf32, #tpu.memory_space<vmem>>, vector<1x128xf32>
      %cst_12 = arith.constant dense<0.000000e+00> : vector<128xf32>
      %20 = vector.multi_reduction <add>, %6, %cst_12 [0] : vector<8x128xf32> to vector<128xf32>
      %21 = vector.shape_cast %20 : vector<128xf32> to vector<1x128xf32>
      %22 = arith.addf %19, %21 : vector<1x128xf32>
      %c0_13 = arith.constant 0 : index
      %c0_14 = arith.constant 0 : index
      %23 = vector.load %arg5[%c0_13, %c0_14] : memref<8x128xf32, #tpu.memory_space<vmem>>, vector<1x128xf32>
      tpu.vector_store %arg5[%c0_13, %c0_14], %22 {strides = array<i32>} : memref<8x128xf32, #tpu.memory_space<vmem>>, vector<1x128xf32>,
      %c0_15 = arith.constant 0 : index
      %c0_16 = arith.constant 0 : index
      %24 = vector.load %arg6[%c0_15, %c0_16] : memref<8x128xf32, #tpu.memory_space<vmem>>, vector<1x128xf32>
      %25 = arith.mulf %6, %6 : vector<8x128xf32>
      %cst_17 = arith.constant dense<0.000000e+00> : vector<128xf32>
      %26 = vector.multi_reduction <add>, %25, %cst_17 [0] : vector<8x128xf32> to vector<128xf32>
      %27 = vector.shape_cast %26 : vector<128xf32> to vector<1x128xf32>
      %28 = arith.addf %24, %27 : vector<1x128xf32>
      %c0_18 = arith.constant 0 : index
      %c0_19 = arith.constant 0 : index
      %29 = vector.load %arg6[%c0_18, %c0_19] : memref<8x128xf32, #tpu.memory_space<vmem>>, vector<1x128xf32>
      tpu.vector_store %arg6[%c0_18, %c0_19], %28 {strides = array<i32>} : memref<8x128xf32, #tpu.memory_space<vmem>>, vector<1x128xf32>,
    } else {
    }
    %17 = arith.extui %13 : i1 to i32
    %c0_i32_9 = arith.constant 0 : i32
    %18 = arith.cmpi ne, %17, %c0_i32_9 : i32
    scf.if %18 {
      %19 = tpu.iota {dimensions = array<i32: 0>} : vector<8x128xi32>
      %20 = vector.broadcast %11 : i32 to vector<8x128xi32>
      %21 = arith.addi %20, %19 : vector<8x128xi32>
      %c8_i32_10 = arith.constant 8 : i32
      %22 = vector.broadcast %c8_i32_10 : i32 to vector<8x128xi32>
      %23 = arith.cmpi slt, %21, %22 : vector<8x128xi32>
      %cst_11 = arith.constant 0.000000e+00 : f32
      %24 = vector.broadcast %cst_11 : f32 to vector<8x128xf32>
      %25 = arith.select %23, %6, %24 : vector<8x128xi1>, vector<8x128xf32>
      %c0_12 = arith.constant 0 : index
      %c0_13 = arith.constant 0 : index
      %26 = vector.load %arg5[%c0_12, %c0_13] : memref<8x128xf32, #tpu.memory_space<vmem>>, vector<1x128xf32>
      %cst_14 = arith.constant dense<0.000000e+00> : vector<128xf32>
      %27 = vector.multi_reduction <add>, %25, %cst_14 [0] : vector<8x128xf32> to vector<128xf32>
      %28 = vector.shape_cast %27 : vector<128xf32> to vector<1x128xf32>
      %29 = arith.addf %26, %28 : vector<1x128xf32>
      %c0_15 = arith.constant 0 : index
      %c0_16 = arith.constant 0 : index
      %30 = vector.load %arg5[%c0_15, %c0_16] : memref<8x128xf32, #tpu.memory_space<vmem>>, vector<1x128xf32>
      tpu.vector_store %arg5[%c0_15, %c0_16], %29 {strides = array<i32>} : memref<8x128xf32, #tpu.memory_space<vmem>>, vector<1x128xf32>,
      %c0_17 = arith.constant 0 : index
      %c0_18 = arith.constant 0 : index
      %31 = vector.load %arg6[%c0_17, %c0_18] : memref<8x128xf32, #tpu.memory_space<vmem>>, vector<1x128xf32>
      %32 = arith.mulf %25, %25 : vector<8x128xf32>
      %cst_19 = arith.constant dense<0.000000e+00> : vector<128xf32>
      %33 = vector.multi_reduction <add>, %32, %cst_19 [0] : vector<8x128xf32> to vector<128xf32>
      %34 = vector.shape_cast %33 : vector<128xf32> to vector<1x128xf32>
      %35 = arith.addf %31, %34 : vector<1x128xf32>
      %c0_20 = arith.constant 0 : index
      %c0_21 = arith.constant 0 : index
      %36 = vector.load %arg6[%c0_20, %c0_21] : memref<8x128xf32, #tpu.memory_space<vmem>>, vector<1x128xf32>
      tpu.vector_store %arg6[%c0_20, %c0_21], %35 {strides = array<i32>} : memref<8x128xf32, #tpu.memory_space<vmem>>, vector<1x128xf32>,
    } else {
    }
    return
  }
  func.func @transform_0(%arg0: i32, %arg1: i32) -> (i32, i32) {
    %c1_i32 = arith.constant 1 : i32
    %0 = arith.muli %arg0, %c1_i32 : i32
    %1 = arith.addi %0, %arg1 : i32
    %c0_i32 = arith.constant 0 : i32
    %c0_i32_0 = arith.constant 0 : i32
    return %1, %c0_i32 : i32, i32
  }
  func.func @transform_1(%arg0: i32, %arg1: i32) -> (i32, i32) {
    %c0_i32 = arith.constant 0 : i32
    %c0_i32_0 = arith.constant 0 : i32
    %c0_i32_1 = arith.constant 0 : i32
    return %c0_i32, %c0_i32_0 : i32, i32
  }
  func.func @transform_2(%arg0: i32, %arg1: i32) -> (i32, i32) {
    %c1_i32 = arith.constant 1 : i32
    %0 = arith.muli %arg0, %c1_i32 : i32
    %1 = arith.addi %0, %arg1 : i32
    %c0_i32 = arith.constant 0 : i32
    %c0_i32_0 = arith.constant 0 : i32
    return %1, %c0_i32 : i32, i32
  }
  func.func @transform_3(%arg0: i32, %arg1: i32) -> (i32, i32) {
    %c0_i32 = arith.constant 0 : i32
    %c0_i32_0 = arith.constant 0 : i32
    return %arg0, %c0_i32 : i32, i32
  }
  func.func @transform_4(%arg0: i32, %arg1: i32) -> (i32, i32) {
    %c0_i32 = arith.constant 0 : i32
    %c0_i32_0 = arith.constant 0 : i32
    return %arg0, %c0_i32 : i32, i32
  }
}

module attributes {stable_mosaic.version = 11 : i64} {
  func.func @_bn2_kernel(%arg0: i32, %arg1: memref<8x128xf32, #tpu.memory_space<vmem>>, %arg2: memref<8x128xf32, #tpu.memory_space<vmem>>, %arg3: memref<8x128xf32, #tpu.memory_space<vmem>>, %arg4: memref<8x128xf32, #tpu.memory_space<vmem>>) attributes {dimension_semantics = [#tpu.dimension_semantics<parallel>], iteration_bounds = array<i64: 1>, scalar_prefetch = 0 : i64, scratch_operands = 0 : i64, tpu.core_type = #tpu.core_type<tc>, window_params = [{transform_indices = @transform_0, window_bounds = array<i64: 8, 128>}, {pipeline_mode = #tpu.pipeline_mode<synchronous>, transform_indices = @transform_1, window_bounds = array<i64: 8, 128>}, {pipeline_mode = #tpu.pipeline_mode<synchronous>, transform_indices = @transform_2, window_bounds = array<i64: 8, 128>}, {transform_indices = @transform_3, window_bounds = array<i64: 8, 128>}]} {
    %c0 = arith.constant 0 : index
    %c0_0 = arith.constant 0 : index
    %0 = vector.load %arg2[%c0, %c0_0] : memref<8x128xf32, #tpu.memory_space<vmem>>, vector<8x128xf32>
    %cst = arith.constant dense<0.000000e+00> : vector<128xf32>
    %1 = vector.multi_reduction <add>, %0, %cst [0] : vector<8x128xf32> to vector<128xf32>
    %2 = vector.shape_cast %1 : vector<128xf32> to vector<1x128xf32>
    %c0_1 = arith.constant 0 : index
    %c0_2 = arith.constant 0 : index
    %3 = vector.load %arg3[%c0_1, %c0_2] : memref<8x128xf32, #tpu.memory_space<vmem>>, vector<8x128xf32>
    %cst_3 = arith.constant dense<0.000000e+00> : vector<128xf32>
    %4 = vector.multi_reduction <add>, %3, %cst_3 [0] : vector<8x128xf32> to vector<128xf32>
    %5 = vector.shape_cast %4 : vector<128xf32> to vector<1x128xf32>
    %cst_4 = arith.constant 1.250000e-01 : f32
    %6 = vector.broadcast %cst_4 : f32 to vector<1x128xf32>
    %7 = arith.mulf %2, %6 : vector<1x128xf32>
    %cst_5 = arith.constant 1.250000e-01 : f32
    %8 = vector.broadcast %cst_5 : f32 to vector<1x128xf32>
    %9 = arith.mulf %5, %8 : vector<1x128xf32>
    %10 = arith.mulf %7, %7 : vector<1x128xf32>
    %11 = arith.subf %9, %10 : vector<1x128xf32>
    %cst_6 = arith.constant 0.000000e+00 : f32
    %12 = vector.broadcast %cst_6 : f32 to vector<1x128xf32>
    %13 = arith.maximumf %11, %12 : vector<1x128xf32>
    %c0_7 = arith.constant 0 : index
    %c0_8 = arith.constant 0 : index
    %14 = vector.load %arg1[%c0_7, %c0_8] : memref<8x128xf32, #tpu.memory_space<vmem>>, vector<8x128xf32>
    %15 = vector.broadcast %7 : vector<1x128xf32> to vector<8x128xf32>
    %16 = arith.subf %14, %15 : vector<8x128xf32>
    %cst_9 = arith.constant 9.99999974E-6 : f32
    %17 = vector.broadcast %cst_9 : f32 to vector<1x128xf32>
    %18 = arith.addf %13, %17 : vector<1x128xf32>
    %19 = math.rsqrt %18 : vector<1x128xf32>
    %20 = vector.broadcast %19 : vector<1x128xf32> to vector<8x128xf32>
    %21 = arith.mulf %16, %20 : vector<8x128xf32>
    %c0_10 = arith.constant 0 : index
    %c0_11 = arith.constant 0 : index
    %22 = vector.load %arg4[%c0_10, %c0_11] : memref<8x128xf32, #tpu.memory_space<vmem>>, vector<8x128xf32>
    tpu.vector_store %arg4[%c0_10, %c0_11], %21 {strides = array<i32>} : memref<8x128xf32, #tpu.memory_space<vmem>>, vector<8x128xf32>,
    return
  }
  func.func @transform_0(%arg0: i32) -> (i32, i32) {
    %c0_i32 = arith.constant 0 : i32
    %c0_i32_0 = arith.constant 0 : i32
    return %arg0, %c0_i32 : i32, i32
  }
  func.func @transform_1(%arg0: i32) -> (i32, i32) {
    %c0_i32 = arith.constant 0 : i32
    %c0_i32_0 = arith.constant 0 : i32
    %c0_i32_1 = arith.constant 0 : i32
    return %c0_i32, %c0_i32_0 : i32, i32
  }
  func.func @transform_2(%arg0: i32) -> (i32, i32) {
    %c0_i32 = arith.constant 0 : i32
    %c0_i32_0 = arith.constant 0 : i32
    %c0_i32_1 = arith.constant 0 : i32
    return %c0_i32, %c0_i32_0 : i32, i32
  }
  func.func @transform_3(%arg0: i32) -> (i32, i32) {
    %c0_i32 = arith.constant 0 : i32
    %c0_i32_0 = arith.constant 0 : i32
    return %arg0, %c0_i32 : i32, i32
  }
}

</mosaic_0001>

<llo_original>
// kernel: projection_mlp_orchestra.5
$region0: #{projection_mlp_orchestra.5}
  #allocation0 [shape = 'u32[]', space=smem, size = 0x4, offset = 0x4, fixed_abs, tag = 'smem constant byte address 0x4 - core index']
  #allocation1 [shape = 'u32[144,128]{1,0:T(1,128)}', space=vmem, size = 0x12000, scoped, tag = 'internal scratch']
  %s0 = inlined_call_operand.vmem [shape: f32[8,128], index: 0, kind: input, shape index: {}]
  %s1 = inlined_call_operand.vmem [shape: f32[8,128], index: 1, kind: input, shape index: {}]
  %s2 = inlined_call_operand.vmem [shape: f32[8,128], index: 2, kind: input, shape index: {}]
  %s3 = inlined_call_operand.hbm [shape: f32[8,128], index: 3, kind: output, shape index: {}]
  %s4 = sld [smem:[#allocation0]]
  $region22: #{projection_mlp_orchestra.5} parent=0
    _
  %s6 = ssub.s32 1, %s4
  %s7 = scalar_select 0, %s6, %s4
  $region1: #{projection_mlp_orchestra.5} parent=0
    #allocation2 [shape = 'u8[4096]{0}', space=vmem, size = 0x1000, scoped, tag = 'output window, operand 0, single buffered']
    #allocation3 [shape = 's32[1]{0}', space=sflag, size = 0x4, scoped, tag = 'scoped memory for projection_mlp_orchestra.5']
    %8 = vsyncpa [#allocation3], 0
    // Predicated region
    $region2: #{projection_mlp_orchestra.5} parent=1 // pred_check
      _
    $region3: #{projection_mlp_orchestra.5} parent=1 // pred_check_branch
      %10 = sbr.rel (0) target = $region5
    $region4: #{projection_mlp_orchestra.5} parent=1 // pred_region
      _
    $region5: #{projection_mlp_orchestra.5} parent=1 // pred_fallthru
      _
    // Predicated region
    $region6: #{projection_mlp_orchestra.5} parent=1 // pred_check
      _
    $region7: #{projection_mlp_orchestra.5} parent=1 // pred_check_branch
      %12 = sbr.rel (0) target = $region9
    $region8: #{projection_mlp_orchestra.5} parent=1 // pred_region
      _
    $region9: #{projection_mlp_orchestra.5} parent=1 // pred_fallthru
      _
    // Predicated region
    $region10: #{projection_mlp_orchestra.5} parent=1 // pred_check
      _
    $region11: #{projection_mlp_orchestra.5} parent=1 // pred_check_branch
      %14 = sbr.rel (0) target = $region13
    $region12: #{projection_mlp_orchestra.5} parent=1 // pred_region
      _
    $region13: #{projection_mlp_orchestra.5} parent=1 // pred_fallthru
      _
    %v15 = vld [vmem:[%s1] sm:$0xff]
    %v16 = vrot.slane %v15, 4
    %v17 = vadd.f32 %v15, %v16
    %v18 = vrot.slane %v17, 2
    %v19 = vadd.f32 %v17, %v18
    %v20 = vrot.slane %v19, 1
    %v21 = vadd.f32 %v19, %v20
    %v22 = vld [vmem:[%s2] sm:$0xff]
    %v23 = vrot.slane %v22, 4
    %v24 = vadd.f32 %v22, %v23
    %v25 = vrot.slane %v24, 2
    %v26 = vadd.f32 %v24, %v25
    %v27 = vrot.slane %v26, 1
    %v28 = vadd.f32 %v26, %v27
    %v29 = vmul.f32 %v21, 0.125
    %v30 = vmul.f32 %v28, 0.125
    %v31 = vmul.f32 %v29, %v29
    %v32 = vsub.f32 %v30, %v31
    %v33 = vmax.f32 %v32, 0.0
    %v34 = vld [vmem:[%s0] sm:$0xff]
    %v35 = vsub.f32 %v34, %v29
    %v36 = vadd.f32 %v33, 1e-05
    %v37 = vrsqrt.pop %v36
    %v38 = vmul.f32 %v35, %v37
    %39 = vst [vmem:[#allocation2] sm:$0xff] %v38
    // Predicated region
    $region14: #{projection_mlp_orchestra.5} parent=1 // pred_check
      _
    $region15: #{projection_mlp_orchestra.5} parent=1 // pred_check_branch
      %41 = sbr.rel (0) target = $region17
    $region16: #{projection_mlp_orchestra.5} parent=1 // pred_region
      %s43 = ssub.s32 128, 128
      %44 = vsyncadd [#allocation3], %s43
      %s46 = sshll.u32 [#allocation2], 4
      %s47 = int_to_ptr.vmem [resolvable:$true] %s46
      %49 = dma.vmem_to_hbm [thread:$0]  %s47, 128, %s3, [#allocation3]
    $region17: #{projection_mlp_orchestra.5} parent=1 // pred_fallthru
      _
    // Predicated region
    $region18: #{projection_mlp_orchestra.5} parent=1 // pred_check
      _
    $region19: #{projection_mlp_orchestra.5} parent=1 // pred_check_branch
      %51 = sbr.rel (0) target = $region21
    $region20: #{projection_mlp_orchestra.5} parent=1 // pred_region
      %52 = dma.done [#allocation3], 128
    $region21: #{projection_mlp_orchestra.5} parent=1 // pred_fallthru
      _
    %53 = vsyncpa [#allocation3], 1

// kernel: projection_mlp_orchestra.3
$region0: #{projection_mlp_orchestra.3}
  #allocation0 [shape = 'u32[]', space=smem, size = 0x4, offset = 0x4, fixed_abs, tag = 'smem constant byte address 0x4 - core index']
  #allocation1 [shape = 'u32[144,128]{1,0:T(1,128)}', space=vmem, size = 0x12000, scoped, tag = 'internal scratch']
  %s0 = inlined_call_operand.hbm [shape: f32[8,32], index: 0, kind: input, shape index: {}]
  %s1 = inlined_call_operand.hbm [shape: bf16[32,128], index: 1, kind: input, shape index: {}]
  %s2 = inlined_call_operand.vmem [shape: bf16[8,128], index: 2, kind: output, shape index: {0}]
  %s3 = inlined_call_operand.vmem [shape: f32[8,128], index: 3, kind: output, shape index: {1}]
  %s4 = inlined_call_operand.vmem [shape: f32[8,128], index: 4, kind: output, shape index: {2}]
  %5 = xla_tuple %s2, %s3, %s4
  %s6 = sld [smem:[#allocation0]]
  $region54: #{projection_mlp_orchestra.3} parent=0
    _
  %s8 = ssub.s32 1, %s6
  %s9 = scalar_select 0, %s8, %s6
  $region1: #{projection_mlp_orchestra.3} parent=0
    #allocation2 [shape = 'u8[4096]{0}', space=vmem, size = 0x1000, scoped, tag = 'input window, operand 0, single buffered']
    #allocation3 [shape = 's32[1]{0}', space=sflag, size = 0x4, scoped, tag = 'scoped memory for projection_mlp_orchestra.3']
    #allocation4 [shape = 'u8[8192]{0}', space=vmem, size = 0x2000, scoped, tag = 'input window, operand 1, single buffered']
    #allocation5 [shape = 's32[1]{0}', space=sflag, size = 0x4, scoped, tag = 'scoped memory for projection_mlp_orchestra.3']
    %10 = vsyncpa [#allocation3], 0
    %11 = vsyncpa [#allocation5], 0
    // Predicated region
    $region2: #{projection_mlp_orchestra.3} parent=1 // pred_check
      _
    $region3: #{projection_mlp_orchestra.3} parent=1 // pred_check_branch
      %13 = sbr.rel (0) target = $region5
    $region4: #{projection_mlp_orchestra.3} parent=1 // pred_region
      %s14 = sadd.s32 0, 0
      %s16 = ssub.s32 128, 128
      %17 = vsyncadd [#allocation3], %s16
      %s18 = smul.addr %s14, 128
      %s19 = scalar_lea.hbm %s0, %s18
      %s21 = sshll.u32 [#allocation2], 4
      %s22 = int_to_ptr.vmem [resolvable:$true] %s21
      %24 = dma.hbm_to_vmem [thread:$0]  %s19, 128, %s22, [#allocation3]
    $region5: #{projection_mlp_orchestra.3} parent=1 // pred_fallthru
      _
    // Predicated region
    $region6: #{projection_mlp_orchestra.3} parent=1 // pred_check
      _
    $region7: #{projection_mlp_orchestra.3} parent=1 // pred_check_branch
      %26 = sbr.rel (0) target = $region9
    $region8: #{projection_mlp_orchestra.3} parent=1 // pred_region
      %s28 = ssub.s32 256, 256
      %29 = vsyncadd [#allocation5], %s28
      %s30 = sshll.u32 [#allocation4], 4
      %s31 = int_to_ptr.vmem [resolvable:$true] %s30
      %36 = dma.hbm_to_vmem [thread:$0]  %s1, 256, %s31, [#allocation5], 64, 64, 4
    $region9: #{projection_mlp_orchestra.3} parent=1 // pred_fallthru
      _
    // Predicated region
    $region10: #{projection_mlp_orchestra.3} parent=1 // pred_check
      _
    $region11: #{projection_mlp_orchestra.3} parent=1 // pred_check_branch
      %38 = sbr.rel (0) target = $region13
    $region12: #{projection_mlp_orchestra.3} parent=1 // pred_region
      %39 = dma.done [#allocation3], 128
    $region13: #{projection_mlp_orchestra.3} parent=1 // pred_fallthru
      _
    // Predicated region
    $region14: #{projection_mlp_orchestra.3} parent=1 // pred_check
      _
    $region15: #{projection_mlp_orchestra.3} parent=1 // pred_check_branch
      %41 = sbr.rel (0) target = $region17
    $region16: #{projection_mlp_orchestra.3} parent=1 // pred_region
      %42 = dma.done [#allocation5], 256
    $region17: #{projection_mlp_orchestra.3} parent=1 // pred_fallthru
      _
    %s43 = sadd.s32 0, 0
    %p44 = scmp.lt.s32.totalorder %s43, 0
    %s45 = scalar_select %p44, %s43, 0
    %s46 = smul.addr %s45, 4
    %s47 = scalar_lea.vmem %s2, %s46
    %s48 = sadd.s32 0, 0
    %s49 = sadd.s32 0, 0
    %p50 = scmp.lt.s32.totalorder %s49, 0
    %s51 = scalar_select %p50, %s49, 0
    %s52 = smul.addr %s51, 4
    %s53 = scalar_lea.vmem %s2, %s52
    %s54 = sadd.s32 0, 0
    %p56 = scmp.eq.s32.totalorder 0, 0
    // Predicated region
    $region18: #{projection_mlp_orchestra.3} parent=1 // pred_check
      %p57 = pneg %p56
    $region19: #{projection_mlp_orchestra.3} parent=1 // pred_check_branch
      %59 = sbr.rel (%p57) target = $region21
    $region20: #{projection_mlp_orchestra.3} parent=1 // pred_region
      %60 = vst [vmem:[%s3] sm:$0xff] 0.0
      %61 = vst [vmem:[%s4] sm:$0xff] 0.0
    $region21: #{projection_mlp_orchestra.3} parent=1 // pred_fallthru
      _
    %v62 = vld [vmem:[#allocation2] sm:$0xff]
    %v63 = vpack.c.bf16 %v62, %v62
    %v64 = vld [vmem:[#allocation4] sm:$0xf]
    %v65 = vld [vmem:[#allocation4 + $0x4] sm:$0xf]
    %v66 = vld [vmem:[#allocation4 + $0x8] sm:$0xf]
    %v67 = vld [vmem:[#allocation4 + $0xc] sm:$0xf]
    %v72 = vunpack.c.l.b16 %v64
    %v73 = vunpack.c.l.b16 %v65
    %v74 = vunpack.c.l.b16 %v66
    %v75 = vunpack.c.l.b16 %v67
    %v76 = vpack.c.b16 %v73, %v72
    %v77 = vpack.c.b16 %v75, %v74
    %vm80 = vcmask 261120
    %v82 = vsel %vm80, %v63, 0
    %84 = vmatprep.subr.bf16.mxu0 0
    %85 = vmatpush1.bf16.msra.mxu0 0
    %86 = vmatprep.subr.bf16.mxu0 0
    %87 = vmatpush1.bf16.msra.mxu0 0
    %88 = vmatprep.subr.bf16.mxu0 0
    %89 = vmatpush1.bf16.msra.mxu0 0
    %90 = vmatprep.subr.bf16.mxu0 0
    %91 = vmatpush1.bf16.msra.mxu0 0
    %92 = vmatprep.subr.bf16.mxu0 0
    %93 = vmatpush1.bf16.msra.mxu0 0
    %94 = vmatprep.subr.bf16.mxu0 0
    %95 = vmatpush1.bf16.msra.mxu0 0
    %96 = vmatprep.subr.bf16.mxu0 0
    %97 = vmatpush1.bf16.msra.mxu0 %v77
    %98 = vmatprep.subr.bf16.mxu0 0
    %99 = vmatpush1.bf16.msra.mxu0 %v76
    %100 = vmatprep.subr.bf16.mxu0 0
    %101 = vmatpush2.bf16.msra.mxu0 0
    %102 = vmatprep.subr.bf16.mxu0 0
    %103 = vmatpush2.bf16.msra.mxu0 0
    %104 = vmatprep.subr.bf16.mxu0 0
    %105 = vmatpush2.bf16.msra.mxu0 0
    %106 = vmatprep.subr.bf16.mxu0 0
    %107 = vmatpush2.bf16.msra.mxu0 0
    %108 = vmatprep.subr.bf16.mxu0 0
    %109 = vmatpush2.bf16.msra.mxu0 0
    %110 = vmatprep.subr.bf16.mxu0 0
    %111 = vmatpush2.bf16.msra.mxu0 0
    %112 = vmatprep.subr.bf16.mxu0 0
    %113 = vmatpush2.bf16.msra.mxu0 0
    %114 = vmatprep.subr.bf16.mxu0 0
    %115 = vmatpush2.bf16.msra.mxu0 0
    %116 = vmatprep.mubr.bf16.mxu0 0
    %117 = vmatmul.mubr.bf16.gmra.mxu0 %v82
    %v118 = vpop.f32.mrf.mxu0
    %v119 = vadd.f32 0.0, %v118
    %v120 = vpop.f32.mrf.mxu0
    %v121 = vpop.f32.mrf.mxu0
    %v122 = vpop.f32.mrf.mxu0
    %123 = vdwg.mxu0
    %v124 = vpack.c.bf16 %v119, %v119
    %125 = vst [vmem:[%s53] sm:$0xf] %v124
    %s126 = sadd.s32 0, 0
    %s127 = smul.u32 %s126, 8
    %s128 = sadd.s32 %s127, 8
    %p129 = scmp.gt.s32.totalorder %s128, 8
    %p130 = scmp.le.s32.totalorder %s128, 8
    // Predicated region
    $region22: #{projection_mlp_orchestra.3} parent=1 // pred_check
      %p131 = pneg %p130
    $region23: #{projection_mlp_orchestra.3} parent=1 // pred_check_branch
      %133 = sbr.rel (%p131) target = $region25
    $region24: #{projection_mlp_orchestra.3} parent=1 // pred_region
      %v134 = vld [vmem:[%s3] sm:$0x1]
      %v135 = vrot.slane %v119, 4
      %v136 = vadd.f32 %v119, %v135
      %v137 = vrot.slane %v136, 2
      %v138 = vadd.f32 %v136, %v137
      %v139 = vrot.slane %v138, 1
      %v140 = vadd.f32 %v138, %v139
      %v141 = vadd.f32 %v134, %v140
      %142 = vst [vmem:[%s3] sm:$0x1] %v141
      %v143 = vld [vmem:[%s4] sm:$0x1]
      %v144 = vmul.f32 %v119, %v119
      %v145 = vrot.slane %v144, 4
      %v146 = vadd.f32 %v144, %v145
      %v147 = vrot.slane %v146, 2
      %v148 = vadd.f32 %v146, %v147
      %v149 = vrot.slane %v148, 1
      %v150 = vadd.f32 %v148, %v149
      %v151 = vadd.f32 %v143, %v150
      %152 = vst [vmem:[%s4] sm:$0x1] %v151
    $region25: #{projection_mlp_orchestra.3} parent=1 // pred_fallthru
      _
    // Predicated region
    $region26: #{projection_mlp_orchestra.3} parent=1 // pred_check
      %p153 = pneg %p129
    $region27: #{projection_mlp_orchestra.3} parent=1 // pred_check_branch
      %155 = sbr.rel (%p153) target = $region29
    $region28: #{projection_mlp_orchestra.3} parent=1 // pred_region
      %v156 = vlaneseq
      %v157 = vshrl.u32 %v156, 7
      %v158 = vstv %s127
      %v159 = vadd.s32 %v158, %v157
      %vm160 = vcmp.lt.s32.totalorder %v159, 8
      %v161 = vsel %vm160, %v119, 0.0
      %v162 = vld [vmem:[%s3] sm:$0x1]
      %v163 = vrot.slane %v161, 4
      %v164 = vadd.f32 %v161, %v163
      %v165 = vrot.slane %v164, 2
      %v166 = vadd.f32 %v164, %v165
      %v167 = vrot.slane %v166, 1
      %v168 = vadd.f32 %v166, %v167
      %v169 = vadd.f32 %v162, %v168
      %170 = vst [vmem:[%s3] sm:$0x1] %v169
      %v171 = vld [vmem:[%s4] sm:$0x1]
      %v172 = vmul.f32 %v161, %v161
      %v173 = vrot.slane %v172, 4
      %v174 = vadd.f32 %v172, %v173
      %v175 = vrot.slane %v174, 2
      %v176 = vadd.f32 %v174, %v175
      %v177 = vrot.slane %v176, 1
      %v178 = vadd.f32 %v176, %v177
      %v179 = vadd.f32 %v171, %v178
      %180 = vst [vmem:[%s4] sm:$0x1] %v179
    $region29: #{projection_mlp_orchestra.3} parent=1 // pred_fallthru
      _
    %s181 = sadd.s32 0, 0
    %p182 = scmp.lt.s32.totalorder %s181, 0
    %s183 = scalar_select %p182, %s181, 0
    %s184 = smul.addr %s183, 4
    %s185 = scalar_lea.vmem %s2, %s184
    // Predicated region
    $region30: #{projection_mlp_orchestra.3} parent=1 // pred_check
      _
    $region31: #{projection_mlp_orchestra.3} parent=1 // pred_check_branch
      %187 = sbr.rel (0) target = $region33
    $region32: #{projection_mlp_orchestra.3} parent=1 // pred_region
      %s188 = sadd.s32 0, 0
    $region33: #{projection_mlp_orchestra.3} parent=1 // pred_fallthru
      _
    // Predicated region
    $region34: #{projection_mlp_orchestra.3} parent=1 // pred_check
      _
    $region35: #{projection_mlp_orchestra.3} parent=1 // pred_check_branch
      %190 = sbr.rel (0) target = $region37
    $region36: #{projection_mlp_orchestra.3} parent=1 // pred_region
      _
    $region37: #{projection_mlp_orchestra.3} parent=1 // pred_fallthru
      _
    // Predicated region
    $region38: #{projection_mlp_orchestra.3} parent=1 // pred_check
      _
    $region39: #{projection_mlp_orchestra.3} parent=1 // pred_check_branch
      %192 = sbr.rel (0) target = $region41
    $region40: #{projection_mlp_orchestra.3} parent=1 // pred_region
      _
    $region41: #{projection_mlp_orchestra.3} parent=1 // pred_fallthru
      _
    // Predicated region
    $region42: #{projection_mlp_orchestra.3} parent=1 // pred_check
      _
    $region43: #{projection_mlp_orchestra.3} parent=1 // pred_check_branch
      %194 = sbr.rel (0) target = $region45
    $region44: #{projection_mlp_orchestra.3} parent=1 // pred_region
      %s195 = sadd.s32 0, 0
      %p196 = scmp.lt.s32.totalorder %s195, 0
      %s197 = scalar_select %p196, %s195, 0
      %s198 = smul.addr %s197, 4
      %s199 = scalar_lea.vmem %s2, %s198
    $region45: #{projection_mlp_orchestra.3} parent=1 // pred_fallthru
      _
    // Predicated region
    $region46: #{projection_mlp_orchestra.3} parent=1 // pred_check
      _
    $region47: #{projection_mlp_orchestra.3} parent=1 // pred_check_branch
      %201 = sbr.rel (0) target = $region49
    $region48: #{projection_mlp_orchestra.3} parent=1 // pred_region
      _
    $region49: #{projection_mlp_orchestra.3} parent=1 // pred_fallthru
      _
    // Predicated region
    $region50: #{projection_mlp_orchestra.3} parent=1 // pred_check
      _
    $region51: #{projection_mlp_orchestra.3} parent=1 // pred_check_branch
      %203 = sbr.rel (0) target = $region53
    $region52: #{projection_mlp_orchestra.3} parent=1 // pred_region
      _
    $region53: #{projection_mlp_orchestra.3} parent=1 // pred_fallthru
      _
    %204 = vsyncpa [#allocation3], 1
    %205 = vsyncpa [#allocation5], 1

// kernel: projection_mlp_orchestra.4
$region0: #{projection_mlp_orchestra.4}
  #allocation0 [shape = 'u32[]', space=smem, size = 0x4, offset = 0x4, fixed_abs, tag = 'smem constant byte address 0x4 - core index']
  #allocation1 [shape = 'u32[144,128]{1,0:T(1,128)}', space=vmem, size = 0x12000, scoped, tag = 'internal scratch']
  %s0 = inlined_call_operand.vmem [shape: bf16[8,128], index: 0, kind: input, shape index: {}]
  %s1 = inlined_call_operand.vmem [shape: f32[8,128], index: 1, kind: input, shape index: {}]
  %s2 = inlined_call_operand.vmem [shape: f32[8,128], index: 2, kind: input, shape index: {}]
  %s3 = inlined_call_operand.vmem [shape: f32[1,128], index: 3, kind: input, shape index: {}]
  %s4 = inlined_call_operand.vmem [shape: f32[1,128], index: 4, kind: input, shape index: {}]
  %s5 = inlined_call_operand.hbm [shape: bf16[128,128], index: 5, kind: input, shape index: {}]
  %s6 = inlined_call_operand.vmem [shape: f32[8,128], index: 6, kind: output, shape index: {0}]
  %s7 = inlined_call_operand.vmem [shape: f32[8,128], index: 7, kind: output, shape index: {1}]
  %s8 = inlined_call_operand.vmem [shape: f32[8,128], index: 8, kind: output, shape index: {2}]
  %9 = xla_tuple %s6, %s7, %s8
  %s10 = sld [smem:[#allocation0]]
  $region66: #{projection_mlp_orchestra.4} parent=0
    _
  %s12 = ssub.s32 1, %s10
  %s13 = scalar_select 0, %s12, %s10
  $region1: #{projection_mlp_orchestra.4} parent=0
    #allocation2 [shape = 'u8[32768]{0}', space=vmem, size = 0x8000, scoped, tag = 'input window, operand 5, single buffered']
    #allocation3 [shape = 's32[1]{0}', space=sflag, size = 0x4, scoped, tag = 'scoped memory for projection_mlp_orchestra.4']
    %14 = vsyncpa [#allocation3], 0
    // Predicated region
    $region2: #{projection_mlp_orchestra.4} parent=1 // pred_check
      _
    $region3: #{projection_mlp_orchestra.4} parent=1 // pred_check_branch
      %16 = sbr.rel (0) target = $region5
    $region4: #{projection_mlp_orchestra.4} parent=1 // pred_region
      %s17 = sadd.s32 0, 0
      %p18 = scmp.lt.s32.totalorder %s17, 0
      %s19 = scalar_select %p18, %s17, 0
      %s20 = smul.addr %s19, 4
      %s21 = scalar_lea.vmem %s0, %s20
      %s22 = sadd.s32 0, 0
    $region5: #{projection_mlp_orchestra.4} parent=1 // pred_fallthru
      _
    // Predicated region
    $region6: #{projection_mlp_orchestra.4} parent=1 // pred_check
      _
    $region7: #{projection_mlp_orchestra.4} parent=1 // pred_check_branch
      %24 = sbr.rel (0) target = $region9
    $region8: #{projection_mlp_orchestra.4} parent=1 // pred_region
      _
    $region9: #{projection_mlp_orchestra.4} parent=1 // pred_fallthru
      _
    // Predicated region
    $region10: #{projection_mlp_orchestra.4} parent=1 // pred_check
      _
    $region11: #{projection_mlp_orchestra.4} parent=1 // pred_check_branch
      %26 = sbr.rel (0) target = $region13
    $region12: #{projection_mlp_orchestra.4} parent=1 // pred_region
      _
    $region13: #{projection_mlp_orchestra.4} parent=1 // pred_fallthru
      _
    // Predicated region
    $region14: #{projection_mlp_orchestra.4} parent=1 // pred_check
      _
    $region15: #{projection_mlp_orchestra.4} parent=1 // pred_check_branch
      %28 = sbr.rel (0) target = $region17
    $region16: #{projection_mlp_orchestra.4} parent=1 // pred_region
      _
    $region17: #{projection_mlp_orchestra.4} parent=1 // pred_fallthru
      _
    // Predicated region
    $region18: #{projection_mlp_orchestra.4} parent=1 // pred_check
      _
    $region19: #{projection_mlp_orchestra.4} parent=1 // pred_check_branch
      %30 = sbr.rel (0) target = $region21
    $region20: #{projection_mlp_orchestra.4} parent=1 // pred_region
      _
    $region21: #{projection_mlp_orchestra.4} parent=1 // pred_fallthru
      _
    // Predicated region
    $region22: #{projection_mlp_orchestra.4} parent=1 // pred_check
      _
    $region23: #{projection_mlp_orchestra.4} parent=1 // pred_check_branch
      %32 = sbr.rel (0) target = $region25
    $region24: #{projection_mlp_orchestra.4} parent=1 // pred_region
      %s34 = ssub.s32 1024, 1024
      %35 = vsyncadd [#allocation3], %s34
      %s36 = sshll.u32 [#allocation2], 4
      %s37 = int_to_ptr.vmem [resolvable:$true] %s36
      %42 = dma.hbm_to_vmem [thread:$0]  %s5, 1024, %s37, [#allocation3], 64, 64, 4
    $region25: #{projection_mlp_orchestra.4} parent=1 // pred_fallthru
      _
    // Predicated region
    $region26: #{projection_mlp_orchestra.4} parent=1 // pred_check
      _
    $region27: #{projection_mlp_orchestra.4} parent=1 // pred_check_branch
      %44 = sbr.rel (0) target = $region29
    $region28: #{projection_mlp_orchestra.4} parent=1 // pred_region
      %45 = dma.done [#allocation3], 1024
    $region29: #{projection_mlp_orchestra.4} parent=1 // pred_fallthru
      _
    %s46 = sadd.s32 0, 0
    %p47 = scmp.lt.s32.totalorder %s46, 0
    %s48 = scalar_select %p47, %s46, 0
    %s49 = smul.addr %s48, 4
    %s50 = scalar_lea.vmem %s0, %s49
    %s51 = sadd.s32 0, 0
    %p52 = scmp.lt.s32.totalorder %s51, 0
    %s53 = scalar_select %p52, %s51, 0
    %s54 = smul.addr %s53, 8
    %s55 = scalar_lea.vmem %s6, %s54
    %s56 = sadd.s32 0, 0
    %p57 = scmp.lt.s32.totalorder %s56, 0
    %s58 = scalar_select %p57, %s56, 0
    %s59 = smul.addr %s58, 4
    %s60 = scalar_lea.vmem %s0, %s59
    %s61 = sadd.s32 0, 0
    %s62 = sadd.s32 0, 0
    %p63 = scmp.lt.s32.totalorder %s62, 0
    %s64 = scalar_select %p63, %s62, 0
    %s65 = smul.addr %s64, 8
    %s66 = scalar_lea.vmem %s6, %s65
    %s67 = sadd.s32 0, 0
    %p69 = scmp.eq.s32.totalorder 0, 0
    // Predicated region
    $region30: #{projection_mlp_orchestra.4} parent=1 // pred_check
      %p70 = pneg %p69
    $region31: #{projection_mlp_orchestra.4} parent=1 // pred_check_branch
      %72 = sbr.rel (%p70) target = $region33
    $region32: #{projection_mlp_orchestra.4} parent=1 // pred_region
      %73 = vst [vmem:[%s7] sm:$0xff] 0.0
      %74 = vst [vmem:[%s8] sm:$0xff] 0.0
    $region33: #{projection_mlp_orchestra.4} parent=1 // pred_fallthru
      _
    %v75 = vld [vmem:[%s1] sm:$0xff]
    %v76 = vrot.slane %v75, 4
    %v77 = vadd.f32 %v75, %v76
    %v78 = vrot.slane %v77, 2
    %v79 = vadd.f32 %v77, %v78
    %v80 = vrot.slane %v79, 1
    %v81 = vadd.f32 %v79, %v80
    %v82 = vld [vmem:[%s2] sm:$0xff]
    %v83 = vrot.slane %v82, 4
    %v84 = vadd.f32 %v82, %v83
    %v85 = vrot.slane %v84, 2
    %v86 = vadd.f32 %v84, %v85
    %v87 = vrot.slane %v86, 1
    %v88 = vadd.f32 %v86, %v87
    %v89 = vmul.f32 %v81, 0.125
    %v90 = vmul.f32 %v88, 0.125
    %v91 = vmul.f32 %v89, %v89
    %v92 = vsub.f32 %v90, %v91
    %v93 = vmax.f32 %v92, 0.0
    %v94 = vadd.f32 %v93, 1e-05
    %v95 = vrsqrt.pop %v94
    %v96 = vld [vmem:[%s3] sm:$0x1]
    %v97 = vmul.f32 %v95, %v96
    %v98 = vld [vmem:[%s4] sm:$0x1]
    %v99 = vmul.f32 %v89, %v97
    %v100 = vsub.f32 %v98, %v99
    %v101 = vld [vmem:[%s60] sm:$0xf]
    %v102 = vunpack.c.l.bf16 %v101
    %v103 = vlaneseq
    %v104 = vshrl.u32 %v103, 7
    %v105 = vsub.s32 0, %v104
    %v106 = vrot.slane %v97, %v105
    %v107 = vmul.f32 %v102, %v106
    %v109 = vlaneseq
    %v110 = vshrl.u32 %v109, 7
    %v111 = vsub.s32 0, %v110
    %v112 = vrot.slane %v100, %v111
    %v114 = vadd.f32 %v107, %v112
    %v115 = vmax.f32 %v114, 0.0
    %v116 = vpack.c.bf16 %v115, %v115
    %v117 = vld [vmem:[#allocation2] sm:$0xf]
    %v118 = vld [vmem:[#allocation2 + $0x4] sm:$0xf]
    %v119 = vld [vmem:[#allocation2 + $0x8] sm:$0xf]
    %v120 = vld [vmem:[#allocation2 + $0xc] sm:$0xf]
    %v121 = vld [vmem:[#allocation2 + $0x10] sm:$0xf]
    %v122 = vld [vmem:[#allocation2 + $0x14] sm:$0xf]
    %v123 = vld [vmem:[#allocation2 + $0x18] sm:$0xf]
    %v124 = vld [vmem:[#allocation2 + $0x1c] sm:$0xf]
    %v125 = vld [vmem:[#allocation2 + $0x20] sm:$0xf]
    %v126 = vld [vmem:[#allocation2 + $0x24] sm:$0xf]
    %v127 = vld [vmem:[#allocation2 + $0x28] sm:$0xf]
    %v128 = vld [vmem:[#allocation2 + $0x2c] sm:$0xf]
    %v129 = vld [vmem:[#allocation2 + $0x30] sm:$0xf]
    %v130 = vld [vmem:[#allocation2 + $0x34] sm:$0xf]
    %v131 = vld [vmem:[#allocation2 + $0x38] sm:$0xf]
    %v132 = vld [vmem:[#allocation2 + $0x3c] sm:$0xf]
    %v149 = vunpack.c.l.b16 %v117
    %v150 = vunpack.c.l.b16 %v118
    %v151 = vunpack.c.l.b16 %v119
    %v152 = vunpack.c.l.b16 %v120
    %v153 = vunpack.c.l.b16 %v121
    %v154 = vunpack.c.l.b16 %v122
    %v155 = vunpack.c.l.b16 %v123
    %v156 = vunpack.c.l.b16 %v124
    %v157 = vunpack.c.l.b16 %v125
    %v158 = vunpack.c.l.b16 %v126
    %v159 = vunpack.c.l.b16 %v127
    %v160 = vunpack.c.l.b16 %v128
    %v161 = vunpack.c.l.b16 %v129
    %v162 = vunpack.c.l.b16 %v130
    %v163 = vunpack.c.l.b16 %v131
    %v164 = vunpack.c.l.b16 %v132
    %v165 = vpack.c.b16 %v150, %v149
    %v166 = vpack.c.b16 %v152, %v151
    %v167 = vpack.c.b16 %v154, %v153
    %v168 = vpack.c.b16 %v156, %v155
    %v169 = vpack.c.b16 %v158, %v157
    %v170 = vpack.c.b16 %v160, %v159
    %v171 = vpack.c.b16 %v162, %v161
    %v172 = vpack.c.b16 %v164, %v163
    %181 = vmatprep.subr.bf16.mxu0 0
    %182 = vmatpush1.bf16.msra.mxu0 %v172
    %183 = vmatprep.subr.bf16.mxu0 0
    %184 = vmatpush1.bf16.msra.mxu0 %v171
    %185 = vmatprep.subr.bf16.mxu0 0
    %186 = vmatpush1.bf16.msra.mxu0 %v170
    %187 = vmatprep.subr.bf16.mxu0 0
    %188 = vmatpush1.bf16.msra.mxu0 %v169
    %189 = vmatprep.subr.bf16.mxu0 0
    %190 = vmatpush1.bf16.msra.mxu0 %v168
    %191 = vmatprep.subr.bf16.mxu0 0
    %192 = vmatpush1.bf16.msra.mxu0 %v167
    %193 = vmatprep.subr.bf16.mxu0 0
    %194 = vmatpush1.bf16.msra.mxu0 %v166
    %195 = vmatprep.subr.bf16.mxu0 0
    %196 = vmatpush1.bf16.msra.mxu0 %v165
    %197 = vmatprep.subr.bf16.mxu0 0
    %198 = vmatpush2.bf16.msra.mxu0 0
    %199 = vmatprep.subr.bf16.mxu0 0
    %200 = vmatpush2.bf16.msra.mxu0 0
    %201 = vmatprep.subr.bf16.mxu0 0
    %202 = vmatpush2.bf16.msra.mxu0 0
    %203 = vmatprep.subr.bf16.mxu0 0
    %204 = vmatpush2.bf16.msra.mxu0 0
    %205 = vmatprep.subr.bf16.mxu0 0
    %206 = vmatpush2.bf16.msra.mxu0 0
    %207 = vmatprep.subr.bf16.mxu0 0
    %208 = vmatpush2.bf16.msra.mxu0 0
    %209 = vmatprep.subr.bf16.mxu0 0
    %210 = vmatpush2.bf16.msra.mxu0 0
    %211 = vmatprep.subr.bf16.mxu0 0
    %212 = vmatpush2.bf16.msra.mxu0 0
    %213 = vmatprep.mubr.bf16.mxu0 0
    %214 = vmatmul.mubr.bf16.gmra.mxu0 %v116
    %v215 = vpop.f32.mrf.mxu0
    %v216 = vadd.f32 0.0, %v215
    %v217 = vpop.f32.mrf.mxu0
    %v218 = vpop.f32.mrf.mxu0
    %v219 = vpop.f32.mrf.mxu0
    %220 = vdwg.mxu0
    %221 = vst [vmem:[%s66] sm:$0xff] %v216
    %s222 = sadd.s32 0, 0
    %s223 = smul.u32 %s222, 8
    %s224 = sadd.s32 %s223, 8
    %p225 = scmp.gt.s32.totalorder %s224, 8
    %p226 = scmp.le.s32.totalorder %s224, 8
    // Predicated region
    $region34: #{projection_mlp_orchestra.4} parent=1 // pred_check
      %p227 = pneg %p226
    $region35: #{projection_mlp_orchestra.4} parent=1 // pred_check_branch
      %229 = sbr.rel (%p227) target = $region37
    $region36: #{projection_mlp_orchestra.4} parent=1 // pred_region
      %v230 = vld [vmem:[%s7] sm:$0x1]
      %v231 = vrot.slane %v216, 4
      %v232 = vadd.f32 %v216, %v231
      %v233 = vrot.slane %v232, 2
      %v234 = vadd.f32 %v232, %v233
      %v235 = vrot.slane %v234, 1
      %v236 = vadd.f32 %v234, %v235
      %v237 = vadd.f32 %v230, %v236
      %238 = vst [vmem:[%s7] sm:$0x1] %v237
      %v239 = vld [vmem:[%s8] sm:$0x1]
      %v240 = vmul.f32 %v216, %v216
      %v241 = vrot.slane %v240, 4
      %v242 = vadd.f32 %v240, %v241
      %v243 = vrot.slane %v242, 2
      %v244 = vadd.f32 %v242, %v243
      %v245 = vrot.slane %v244, 1
      %v246 = vadd.f32 %v244, %v245
      %v247 = vadd.f32 %v239, %v246
      %248 = vst [vmem:[%s8] sm:$0x1] %v247
    $region37: #{projection_mlp_orchestra.4} parent=1 // pred_fallthru
      _
    // Predicated region
    $region38: #{projection_mlp_orchestra.4} parent=1 // pred_check
      %p249 = pneg %p225
    $region39: #{projection_mlp_orchestra.4} parent=1 // pred_check_branch
      %251 = sbr.rel (%p249) target = $region41
    $region40: #{projection_mlp_orchestra.4} parent=1 // pred_region
      %v252 = vlaneseq
      %v253 = vshrl.u32 %v252, 7
      %v254 = vstv %s223
      %v255 = vadd.s32 %v254, %v253
      %vm256 = vcmp.lt.s32.totalorder %v255, 8
      %v257 = vsel %vm256, %v216, 0.0
      %v258 = vld [vmem:[%s7] sm:$0x1]
      %v259 = vrot.slane %v257, 4
      %v260 = vadd.f32 %v257, %v259
      %v261 = vrot.slane %v260, 2
      %v262 = vadd.f32 %v260, %v261
      %v263 = vrot.slane %v262, 1
      %v264 = vadd.f32 %v262, %v263
      %v265 = vadd.f32 %v258, %v264
      %266 = vst [vmem:[%s7] sm:$0x1] %v265
      %v267 = vld [vmem:[%s8] sm:$0x1]
      %v268 = vmul.f32 %v257, %v257
      %v269 = vrot.slane %v268, 4
      %v270 = vadd.f32 %v268, %v269
      %v271 = vrot.slane %v270, 2
      %v272 = vadd.f32 %v270, %v271
      %v273 = vrot.slane %v272, 1
      %v274 = vadd.f32 %v272, %v273
      %v275 = vadd.f32 %v267, %v274
      %276 = vst [vmem:[%s8] sm:$0x1] %v275
    $region41: #{projection_mlp_orchestra.4} parent=1 // pred_fallthru
      _
    %s277 = sadd.s32 0, 0
    %p278 = scmp.lt.s32.totalorder %s277, 0
    %s279 = scalar_select %p278, %s277, 0
    %s280 = smul.addr %s279, 8
    %s281 = scalar_lea.vmem %s6, %s280
    // Predicated region
    $region42: #{projection_mlp_orchestra.4} parent=1 // pred_check
      _
    $region43: #{projection_mlp_orchestra.4} parent=1 // pred_check_branch
      %283 = sbr.rel (0) target = $region45
    $region44: #{projection_mlp_orchestra.4} parent=1 // pred_region
      %s284 = sadd.s32 0, 0
    $region45: #{projection_mlp_orchestra.4} parent=1 // pred_fallthru
      _
    // Predicated region
    $region46: #{projection_mlp_orchestra.4} parent=1 // pred_check
      _
    $region47: #{projection_mlp_orchestra.4} parent=1 // pred_check_branch
      %286 = sbr.rel (0) target = $region49
    $region48: #{projection_mlp_orchestra.4} parent=1 // pred_region
      _
    $region49: #{projection_mlp_orchestra.4} parent=1 // pred_fallthru
      _
    // Predicated region
    $region50: #{projection_mlp_orchestra.4} parent=1 // pred_check
      _
    $region51: #{projection_mlp_orchestra.4} parent=1 // pred_check_branch
      %288 = sbr.rel (0) target = $region53
    $region52: #{projection_mlp_orchestra.4} parent=1 // pred_region
      _
    $region53: #{projection_mlp_orchestra.4} parent=1 // pred_fallthru
      _
    // Predicated region
    $region54: #{projection_mlp_orchestra.4} parent=1 // pred_check
      _
    $region55: #{projection_mlp_orchestra.4} parent=1 // pred_check_branch
      %290 = sbr.rel (0) target = $region57
    $region56: #{projection_mlp_orchestra.4} parent=1 // pred_region
      %s291 = sadd.s32 0, 0
      %p292 = scmp.lt.s32.totalorder %s291, 0
      %s293 = scalar_select %p292, %s291, 0
      %s294 = smul.addr %s293, 8
      %s295 = scalar_lea.vmem %s6, %s294
    $region57: #{projection_mlp_orchestra.4} parent=1 // pred_fallthru
      _
    // Predicated region
    $region58: #{projection_mlp_orchestra.4} parent=1 // pred_check
      _
    $region59: #{projection_mlp_orchestra.4} parent=1 // pred_check_branch
      %297 = sbr.rel (0) target = $region61
    $region60: #{projection_mlp_orchestra.4} parent=1 // pred_region
      _
    $region61: #{projection_mlp_orchestra.4} parent=1 // pred_fallthru
      _
    // Predicated region
    $region62: #{projection_mlp_orchestra.4} parent=1 // pred_check
      _
    $region63: #{projection_mlp_orchestra.4} parent=1 // pred_check_branch
      %299 = sbr.rel (0) target = $region65
    $region64: #{projection_mlp_orchestra.4} parent=1 // pred_region
      _
    $region65: #{projection_mlp_orchestra.4} parent=1 // pred_fallthru
      _
    %300 = vsyncpa [#allocation3], 1

</llo_original>
